<compile_context>
chip_gen: v5e
topology: v5e:2x2
jax: 0.10.0
libtpu: 0.0.40
codegen_flags: <defaults>
</compile_context>

<pallas_src>
from functools import partial

import jax
import jax.numpy as jnp
from jax.experimental import pallas as pl
from jax.experimental.pallas import tpu as pltpu

_LANE = 128
_TARGET_BLOCK_BYTES = 2 * 1024 * 1024  # ~2 MiB blocks; 2 arrays x 2 bufs = 8 MiB VMEM


# -----------------------------------------------------------------------------
# Backward kernel: out = (-alpha) * grad   (alpha is a compile-time constant)
# -----------------------------------------------------------------------------
def _neg_scale_kernel(g_ref, o_ref, *, neg_alpha):
    scale = jnp.asarray(neg_alpha, dtype=o_ref.dtype)
    o_ref[...] = g_ref[...] * scale


def _pick_tile_rows(rows, cols, itemsize):
    """Rows per block: ~_TARGET_BLOCK_BYTES, multiple of 8, capped at rows."""
    tr = max(1, _TARGET_BLOCK_BYTES // (cols * itemsize))
    if tr >= rows:
        return rows  # full extent -> always a legal block shape
    tr = max(8, (tr // 8) * 8)
    return min(tr, rows)


def _neg_scale(g, alpha):
    """Compute -alpha * g with a tiled Pallas kernel (dtype preserved)."""
    orig_shape = g.shape
    dtype = g.dtype
    itemsize = jnp.dtype(dtype).itemsize
    n = g.size
    if n == 0:
        return g

    flat = g.reshape(-1)
    pad = (-n) % _LANE
    if pad:  # only taken when n is not a multiple of 128
        flat = jnp.pad(flat, (0, pad))
    total = n + pad

    # Wide, lane-dense columns (large multiple of 128) to amortize per-step
    # overhead and get long unmasked vector stores.
    cols = _LANE
    for c in (2048, 1024, 512, 256):
        if total % c == 0:
            cols = c
            break
    rows = total // cols
    g2d = flat.reshape(rows, cols)

    tile_r = _pick_tile_rows(rows, cols, itemsize)
    grid = (pl.cdiv(rows, tile_r),)

    kernel = partial(_neg_scale_kernel, neg_alpha=-float(alpha))

    out2d = pl.pallas_call(
        kernel,
        out_shape=jax.ShapeDtypeStruct((rows, cols), dtype),
        grid=grid,
        in_specs=[pl.BlockSpec((tile_r, cols), lambda i: (i, 0))],
        out_specs=pl.BlockSpec((tile_r, cols), lambda i: (i, 0)),
        compiler_params=pltpu.CompilerParams(
            dimension_semantics=("parallel",),
        ),
        cost_estimate=pl.CostEstimate(
            flops=rows * cols,
            transcendentals=0,
            bytes_accessed=2 * rows * cols * itemsize,
        ),
    )(g2d)

    out = out2d.reshape(-1)
    if pad:
        out = out[:n]
    return out.reshape(orig_shape)


# -----------------------------------------------------------------------------
# GradientReversalLayer with custom VJP matching PyTorch semantics
# -----------------------------------------------------------------------------
@partial(jax.custom_vjp, nondiff_argnums=(1,))
def gradient_reversal(x, alpha=1.0):
    # Forward is identity (view_as): no kernel, no copy.
    return x


def _grl_fwd(x, alpha):
    return x, None  # no residuals needed


def _grl_bwd(alpha, _, g):
    return (_neg_scale(g, alpha),)


gradient_reversal.defvjp(_grl_fwd, _grl_bwd)


class GradientReversalLayer:
    """JAX/Pallas equivalent of the PyTorch GradientReversalLayer."""

    def __init__(self, alpha=1.0):
        self.alpha = float(alpha)

    def __call__(self, x):
        return gradient_reversal(x, self.alpha)


# -----------------------------------------------------------------------------
# Main
# -----------------------------------------------------------------------------
if __name__ == "__main__":
    key = jax.random.PRNGKey(0)
    # NCHW input, matching PyTorch conv-style conventions.
    x = jax.random.normal(key, (2, 4, 16, 16), dtype=jnp.float32)

    layer = GradientReversalLayer(alpha=1.0)

    # Forward: identity.
    y = layer(x)
    jax.block_until_ready(y)
    assert y.shape == x.shape and y.dtype == x.dtype
    assert jnp.allclose(y, x), "forward must be identity"

    # Backward: gradient is reversed (-alpha * upstream grad) via the Pallas kernel.
    loss_fn = lambda t: jnp.sum(layer(t) * 2.0)
    g = jax.grad(loss_fn)(x)
    jax.block_until_ready(g)
    assert g.shape == x.shape and g.dtype == x.dtype
    assert jnp.allclose(g, -2.0 * jnp.ones_like(x)), "backward must be -alpha*grad"

    print("KERNEL_OK")
</pallas_src>

<mosaic_0001>
module attributes {stable_mosaic.version = 11 : i64} {
  func.func @_neg_scale_kernel(%arg0: i32, %arg1: memref<1x2048xf32, #tpu.memory_space<vmem>>, %arg2: memref<1x2048xf32, #tpu.memory_space<vmem>>) attributes {dimension_semantics = [#tpu.dimension_semantics<parallel>], iteration_bounds = array<i64: 1>, scalar_prefetch = 0 : i64, scratch_operands = 0 : i64, tpu.core_type = #tpu.core_type<tc>, window_params = [{transform_indices = @transform_0, window_bounds = array<i64: 1, 2048>}, {transform_indices = @transform_1, window_bounds = array<i64: 1, 2048>}]} {
    %c0 = arith.constant 0 : index
    %c0_0 = arith.constant 0 : index
    %0 = vector.load %arg1[%c0, %c0_0] : memref<1x2048xf32, #tpu.memory_space<vmem>>, vector<1x2048xf32>
    %cst = arith.constant -1.000000e+00 : f32
    %1 = vector.broadcast %cst : f32 to vector<1x2048xf32>
    %2 = arith.mulf %0, %1 : vector<1x2048xf32>
    %c0_1 = arith.constant 0 : index
    %c0_2 = arith.constant 0 : index
    %3 = vector.load %arg2[%c0_1, %c0_2] : memref<1x2048xf32, #tpu.memory_space<vmem>>, vector<1x2048xf32>
    tpu.vector_store %arg2[%c0_1, %c0_2], %2 {strides = array<i32>} : memref<1x2048xf32, #tpu.memory_space<vmem>>, vector<1x2048xf32>,
    return
  }
  func.func @transform_0(%arg0: i32) -> (i32, i32) {
    %c0_i32 = arith.constant 0 : i32
    %c0_i32_0 = arith.constant 0 : i32
    return %arg0, %c0_i32 : i32, i32
  }
  func.func @transform_1(%arg0: i32) -> (i32, i32) {
    %c0_i32 = arith.constant 0 : i32
    %c0_i32_0 = arith.constant 0 : i32
    return %arg0, %c0_i32 : i32, i32
  }
}

</mosaic_0001>

<llo_original>
// kernel: tpu_custom_call.1
$region0: #{tpu_custom_call.1}
  #allocation0 [shape = 'u32[]', space=smem, size = 0x4, offset = 0x4, fixed_abs, tag = 'smem constant byte address 0x4 - core index']
  #allocation1 [shape = 'u32[72,128]{1,0:T(1,128)}', space=vmem, size = 0x9000, scoped, tag = 'internal scratch']
  %s0 = inlined_call_operand.hbm [shape: f32[1,2048], index: 0, kind: input, shape index: {}]
  %s1 = inlined_call_operand.hbm [shape: f32[1,2048], index: 1, kind: output, shape index: {}]
  %s2 = sld [smem:[#allocation0]]
  $region18: #{tpu_custom_call.1} parent=0
    _
  %s4 = ssub.s32 1, %s2
  %s5 = scalar_select 0, %s4, %s2
  $region1: #{tpu_custom_call.1} parent=0
    #allocation2 [shape = 'u8[8192]{0}', space=vmem, size = 0x2000, scoped, tag = 'input window, operand 0, single buffered']
    #allocation3 [shape = 's32[1]{0}', space=sflag, size = 0x4, scoped, tag = 'scoped memory for tpu_custom_call.1']
    #allocation4 [shape = 's32[1]{0}', space=sflag, size = 0x4, scoped, tag = 'scoped memory for tpu_custom_call.1']
    #allocation5 [shape = 'u8[8192]{0}', space=vmem, size = 0x2000, scoped, tag = 'output window, operand 0, single buffered']
    %6 = vsyncpa [#allocation3], 0
    %7 = vsyncpa [#allocation4], 0
    // Predicated region
    $region2: #{tpu_custom_call.1} parent=1 // pred_check
      _
    $region3: #{tpu_custom_call.1} parent=1 // pred_check_branch
      %9 = sbr.rel (0) target = $region5
    $region4: #{tpu_custom_call.1} parent=1 // pred_region
      %11 = vsyncadd [#allocation3], 0
      %s13 = sshll.u32 %s0, 4
      %s14 = int_to_ptr.hbm [resolvable:$true] %s13
      %s15 = sshll.u32 [#allocation2], 4
      %s16 = int_to_ptr.vmem [resolvable:$true] %s15
      %18 = dma.hbm_to_vmem [thread:$0]  %s14, 256, %s16, [#allocation3]
    $region5: #{tpu_custom_call.1} parent=1 // pred_fallthru
      _
    // Predicated region
    $region6: #{tpu_custom_call.1} parent=1 // pred_check
      _
    $region7: #{tpu_custom_call.1} parent=1 // pred_check_branch
      %20 = sbr.rel (0) target = $region9
    $region8: #{tpu_custom_call.1} parent=1 // pred_region
      %22 = dma.done [#allocation3], 256
    $region9: #{tpu_custom_call.1} parent=1 // pred_fallthru
      _
    %v23 = vld [vmem:[#allocation2] sm:$0xff]
    %v24 = vld [vmem:[#allocation2 + $0x8] sm:$0xff]
    %v25 = vmul.f32 %v23, -1.0
    %v26 = vmul.f32 %v24, -1.0
    %27 = vst [vmem:[#allocation5] sm:$0xff] %v25
    %28 = vst [vmem:[#allocation5 + $0x8] sm:$0xff] %v26
    // Predicated region
    $region10: #{tpu_custom_call.1} parent=1 // pred_check
      _
    $region11: #{tpu_custom_call.1} parent=1 // pred_check_branch
      %30 = sbr.rel (0) target = $region13
    $region12: #{tpu_custom_call.1} parent=1 // pred_region
      %32 = vsyncadd [#allocation4], 0
      %s34 = sshll.u32 [#allocation5], 4
      %s35 = int_to_ptr.vmem [resolvable:$true] %s34
      %s36 = sshll.u32 %s1, 4
      %s37 = int_to_ptr.hbm [resolvable:$true] %s36
      %39 = dma.vmem_to_hbm [thread:$0]  %s35, 256, %s37, [#allocation4]
    $region13: #{tpu_custom_call.1} parent=1 // pred_fallthru
      _
    // Predicated region
    $region14: #{tpu_custom_call.1} parent=1 // pred_check
      _
    $region15: #{tpu_custom_call.1} parent=1 // pred_check_branch
      %41 = sbr.rel (0) target = $region17
    $region16: #{tpu_custom_call.1} parent=1 // pred_region
      %43 = dma.done [#allocation4], 256
    $region17: #{tpu_custom_call.1} parent=1 // pred_fallthru
      _
    %44 = vsyncpa [#allocation3], 1
    %45 = vsyncpa [#allocation4], 1

</llo_original>
